<compile_context>
chip_gen: v5e
topology: v5e:2x2
jax: 0.10.0
libtpu: 0.0.40
codegen_flags: <defaults>
</compile_context>

<pallas_src>
import functools

import jax
import jax.numpy as jnp
from jax import lax
from jax.experimental import pallas as pl
from jax.experimental.pallas import tpu as pltpu

_LANE = 128
_VMEM_LIMIT_BYTES = 32 * 1024 * 1024          # > tile budget, < v7x physical 64 MiB
_VMEM_TILE_BUDGET = 20 * 1024 * 1024          # 2*in + 2*out (double buffered) + f32 temp


def _scale_norm_kernel(g_ref, x_ref, o_ref, *, inv_scale, eps):
    """Per-tile ScaleNorm, one logical row per physical row.

    g_ref:  (1, 1) scalar gain in SMEM
    x_ref:  (tile_rows, D) input tile in VMEM
    o_ref:  (tile_rows, D) output tile in VMEM
    """
    x = x_ref[...].astype(jnp.float32)
    sq_sum = jnp.sum(x * x, axis=-1, keepdims=True)               # (rows, 1)

    # Original math: norm = sqrt(sq_sum) * scale; norm = max(norm, eps);
    #                out  = x / norm * g
    # Rewritten:     norm <= eps  <=>  sq_sum <= (eps / scale)^2
    #                1/norm = rsqrt(sq_sum) * inv_scale
    thresh = jnp.float32((eps * inv_scale) ** 2)
    inv = jnp.where(sq_sum <= thresh,
                    jnp.float32(1.0 / eps),
                    lax.rsqrt(sq_sum) * jnp.float32(inv_scale))
    row_scale = inv * g_ref[0, 0]                                  # (rows, 1)
    o_ref[...] = (x * row_scale).astype(o_ref.dtype)


def _scale_norm_kernel_packed(g_ref, x_ref, o_ref, *, inv_scale, eps, k, d):
    """Per-tile ScaleNorm with k logical rows packed per 128-lane physical row.

    g_ref:  (1, 1) scalar gain in SMEM
    x_ref:  (tile_rows, k*d) input tile in VMEM (k*d == 128)
    o_ref:  (tile_rows, k*d) output tile in VMEM
    """
    g = g_ref[0, 0]
    thresh = jnp.float32((eps * inv_scale) ** 2)
    inv_eps = jnp.float32(1.0 / eps)
    inv_scale_f = jnp.float32(inv_scale)
    # Static, fully-unrolled segment loop (k <= 16). HBM traffic stays dense;
    # the per-segment lane slices only cost VPU/XLU slack.
    for j in range(k):
        lo = j * d
        xs = x_ref[:, lo:lo + d].astype(jnp.float32)               # (rows, d)
        sq_sum = jnp.sum(xs * xs, axis=-1, keepdims=True)          # (rows, 1)
        inv = jnp.where(sq_sum <= thresh, inv_eps,
                        lax.rsqrt(sq_sum) * inv_scale_f)
        o_ref[:, lo:lo + d] = (xs * (inv * g)).astype(o_ref.dtype)


def _sublane_multiple(itemsize):
    """Row alignment to match packed-sublane layout: 8 (f32), 16 (bf16), 32 (i8)."""
    return max(8, 32 // max(1, int(itemsize)))


def _auto_tile_rows(n_rows, row_width, in_itemsize, out_itemsize,
                    vmem_budget_bytes=_VMEM_TILE_BUDGET):
    """Largest row tile whose total VMEM footprint fits the budget.

    Footprint per element: 2x input (double-buffered) + 2x output
    (double-buffered) + 4 bytes for the in-kernel f32 upcast temporary.
    """
    per_elem = 2 * in_itemsize + 2 * out_itemsize + 4
    mult = _sublane_multiple(min(in_itemsize, out_itemsize))
    rows = vmem_budget_bytes // max(1, row_width * per_elem)
    n_rounded = ((n_rows + mult - 1) // mult) * mult
    rows = min(rows, n_rounded)                  # never larger than the problem
    if n_rounded > mult:
        # Keep >= 2 grid steps so both v7x TensorCores get work
        # (harmless no-op on single-TC v5e/v6e).
        rows = min(rows, max(mult, n_rounded // 2))
    rows -= rows % mult
    return max(mult, rows)


def scale_norm(x, g, *, dim=None, eps=1e-5, tile_rows=None):
    """ScaleNorm forward.

    Args:
        x: array of shape [..., D]
        g: scalar gain parameter (shape (1,) like nn.Parameter(torch.ones(1)))
        dim: normalization dim size (defaults to x.shape[-1]); scale = dim**-0.5
        eps: clamp minimum.
        tile_rows: optional override for the row-tile size.
    """
    orig_shape = x.shape
    D = orig_shape[-1]
    if dim is None:
        dim = D
    inv_scale = float(dim) ** 0.5                # 1 / scale, scale = dim ** -0.5

    x2d = x.reshape(-1, D)
    N = x2d.shape[0]
    g2d = jnp.asarray(g, dtype=jnp.float32).reshape(1, 1)

    # Lane-dense packing for small D: put k = 128 // D logical rows into one
    # 128-lane physical row so HBM loads/stores are unmasked.
    k = 1
    if 8 <= D < _LANE and _LANE % D == 0:
        k_cand = _LANE // D
        if N >= k_cand and N % k_cand == 0:
            k = k_cand
    row_width = k * D
    n_rows = N // k
    xk = x2d.reshape(n_rows, row_width)          # contiguous: free metadata reshape

    itemsize = jnp.dtype(x.dtype).itemsize
    if tile_rows is None:
        tile_rows = _auto_tile_rows(n_rows, row_width, itemsize, itemsize)

    if k == 1:
        kernel = functools.partial(_scale_norm_kernel,
                                   inv_scale=inv_scale, eps=float(eps))
    else:
        kernel = functools.partial(_scale_norm_kernel_packed,
                                   inv_scale=inv_scale, eps=float(eps), k=k, d=D)

    out = pl.pallas_call(
        kernel,
        out_shape=jax.ShapeDtypeStruct((n_rows, row_width), x.dtype),
        grid_spec=pltpu.PrefetchScalarGridSpec(
            num_scalar_prefetch=0,
            grid=(pl.cdiv(n_rows, tile_rows),),
            in_specs=[
                pl.BlockSpec(memory_space=pltpu.SMEM),                 # g (scalar)
                pl.BlockSpec((tile_rows, row_width), lambda i: (i, 0)),  # x tile
            ],
            out_specs=pl.BlockSpec((tile_rows, row_width), lambda i: (i, 0)),
        ),
        compiler_params=pltpu.CompilerParams(
            dimension_semantics=("parallel",),
            vmem_limit_bytes=_VMEM_LIMIT_BYTES),
    )(g2d, xk)

    return out.reshape(orig_shape)


def scale_norm_ref(x, g, *, dim=None, eps=1e-5):
    """Pure-JAX reference matching the PyTorch forward."""
    D = x.shape[-1]
    if dim is None:
        dim = D
    scale = float(dim) ** (-0.5)
    norm = jnp.linalg.norm(x.astype(jnp.float32), axis=-1, keepdims=True) * scale
    norm = jnp.maximum(norm, eps)
    return (x.astype(jnp.float32) / norm
            * jnp.asarray(g, jnp.float32).reshape(())).astype(x.dtype)


if __name__ == "__main__":
    key = jax.random.PRNGKey(0)

    # Small transformer-token tensor [B, S, D]; D=32 exercises the lane-dense
    # packed path (k = 4 logical rows per 128-lane physical row).
    B, S, D = 2, 8, 32
    x = jax.random.normal(key, (B, S, D), dtype=jnp.float32)
    g = jnp.ones((1,), dtype=jnp.float32)      # nn.Parameter(torch.ones(1))

    out = jax.block_until_ready(scale_norm(x, g, dim=D, eps=1e-5))
    ref = scale_norm_ref(x, g, dim=D, eps=1e-5)
    assert out.shape == x.shape
    assert jnp.allclose(out, ref, atol=1e-5, rtol=1e-5), "packed-path mismatch"

    # Ragged row count (N=15 not divisible by k or 8) -> unpacked masked path,
    # partial last grid block, non-unit gain.
    k2 = jax.random.PRNGKey(1)
    x2 = jax.random.normal(k2, (3, 5, D), dtype=jnp.float32)
    g2 = jnp.full((1,), 0.75, dtype=jnp.float32)
    out2 = jax.block_until_ready(scale_norm(x2, g2, dim=D, eps=1e-5))
    ref2 = scale_norm_ref(x2, g2, dim=D, eps=1e-5)
    assert out2.shape == x2.shape
    assert jnp.allclose(out2, ref2, atol=1e-5, rtol=1e-5), "ragged mismatch"

    # Lane-dense D=128, bf16 input -> dtype-aware tiling (16-row sublane multiple).
    k3 = jax.random.PRNGKey(2)
    x3 = jax.random.normal(k3, (2, 8, 128), dtype=jnp.bfloat16)
    g3 = jnp.full((1,), 1.25, dtype=jnp.float32)
    out3 = jax.block_until_ready(scale_norm(x3, g3, dim=128, eps=1e-5))
    ref3 = scale_norm_ref(x3, g3, dim=128, eps=1e-5)
    assert out3.shape == x3.shape
    assert jnp.allclose(out3.astype(jnp.float32), ref3.astype(jnp.float32),
                        atol=2e-2, rtol=2e-2), "bf16 mismatch"

    print("KERNEL_OK")
</pallas_src>

<mosaic_0001>
module attributes {stable_mosaic.version = 11 : i64} {
  func.func @_scale_norm_kernel_packed(%arg0: i32, %arg1: memref<1x1xf32, #tpu.memory_space<smem>>, %arg2: memref<8x128xf32, #tpu.memory_space<vmem>>, %arg3: memref<8x128xf32, #tpu.memory_space<vmem>>) attributes {dimension_semantics = [#tpu.dimension_semantics<parallel>], iteration_bounds = array<i64: 1>, scalar_prefetch = 0 : i64, scratch_operands = 0 : i64, tpu.core_type = #tpu.core_type<tc>, window_params = [{transform_indices = @transform_0, window_bounds = array<i64: 1, 1>}, {transform_indices = @transform_1, window_bounds = array<i64: 8, 128>}, {transform_indices = @transform_2, window_bounds = array<i64: 8, 128>}]} {
    %c0 = arith.constant 0 : index
    %c0_0 = arith.constant 0 : index
    %0 = memref.load %arg1[%c0, %c0_0] : memref<1x1xf32, #tpu.memory_space<smem>>
    %c0_1 = arith.constant 0 : index
    %c0_2 = arith.constant 0 : index
    %1 = vector.load %arg2[%c0_1, %c0_2] : memref<8x128xf32, #tpu.memory_space<vmem>>, vector<8x32xf32>
    %2 = arith.mulf %1, %1 : vector<8x32xf32>
    %cst = arith.constant dense<0.000000e+00> : vector<8xf32>
    %3 = vector.multi_reduction <add>, %2, %cst [1] : vector<8x32xf32> to vector<8xf32>
    %4 = vector.shape_cast %3 : vector<8xf32> to vector<8x1xf32>
    %cst_3 = arith.constant 3.200000e-09 : f32
    %5 = vector.broadcast %cst_3 : f32 to vector<8x1xf32>
    %6 = arith.cmpf ole, %4, %5 : vector<8x1xf32>
    %7 = math.rsqrt %4 : vector<8x1xf32>
    %cst_4 = arith.constant 5.65685415 : f32
    %8 = vector.broadcast %cst_4 : f32 to vector<8x1xf32>
    %9 = arith.mulf %7, %8 : vector<8x1xf32>
    %cst_5 = arith.constant 1.000000e+05 : f32
    %10 = vector.broadcast %cst_5 : f32 to vector<8x1xf32>
    %11 = arith.select %6, %10, %9 : vector<8x1xi1>, vector<8x1xf32>
    %12 = vector.broadcast %0 : f32 to vector<8x1xf32>
    %13 = arith.mulf %11, %12 : vector<8x1xf32>
    %14 = vector.broadcast %13 : vector<8x1xf32> to vector<8x32xf32>
    %15 = arith.mulf %1, %14 : vector<8x32xf32>
    %c0_6 = arith.constant 0 : index
    %c0_7 = arith.constant 0 : index
    %16 = vector.load %arg3[%c0_6, %c0_7] : memref<8x128xf32, #tpu.memory_space<vmem>>, vector<8x32xf32>
    tpu.vector_store %arg3[%c0_6, %c0_7], %15 {strides = array<i32>} : memref<8x128xf32, #tpu.memory_space<vmem>>, vector<8x32xf32>,
    %c0_8 = arith.constant 0 : index
    %c32 = arith.constant 32 : index
    %17 = vector.load %arg2[%c0_8, %c32] : memref<8x128xf32, #tpu.memory_space<vmem>>, vector<8x32xf32>
    %18 = arith.mulf %17, %17 : vector<8x32xf32>
    %cst_9 = arith.constant dense<0.000000e+00> : vector<8xf32>
    %19 = vector.multi_reduction <add>, %18, %cst_9 [1] : vector<8x32xf32> to vector<8xf32>
    %20 = vector.shape_cast %19 : vector<8xf32> to vector<8x1xf32>
    %cst_10 = arith.constant 3.200000e-09 : f32
    %21 = vector.broadcast %cst_10 : f32 to vector<8x1xf32>
    %22 = arith.cmpf ole, %20, %21 : vector<8x1xf32>
    %23 = math.rsqrt %20 : vector<8x1xf32>
    %cst_11 = arith.constant 5.65685415 : f32
    %24 = vector.broadcast %cst_11 : f32 to vector<8x1xf32>
    %25 = arith.mulf %23, %24 : vector<8x1xf32>
    %cst_12 = arith.constant 1.000000e+05 : f32
    %26 = vector.broadcast %cst_12 : f32 to vector<8x1xf32>
    %27 = arith.select %22, %26, %25 : vector<8x1xi1>, vector<8x1xf32>
    %28 = vector.broadcast %0 : f32 to vector<8x1xf32>
    %29 = arith.mulf %27, %28 : vector<8x1xf32>
    %30 = vector.broadcast %29 : vector<8x1xf32> to vector<8x32xf32>
    %31 = arith.mulf %17, %30 : vector<8x32xf32>
    %c0_13 = arith.constant 0 : index
    %c32_14 = arith.constant 32 : index
    %32 = vector.load %arg3[%c0_13, %c32_14] : memref<8x128xf32, #tpu.memory_space<vmem>>, vector<8x32xf32>
    tpu.vector_store %arg3[%c0_13, %c32_14], %31 {strides = array<i32>} : memref<8x128xf32, #tpu.memory_space<vmem>>, vector<8x32xf32>,
    %c0_15 = arith.constant 0 : index
    %c64 = arith.constant 64 : index
    %33 = vector.load %arg2[%c0_15, %c64] : memref<8x128xf32, #tpu.memory_space<vmem>>, vector<8x32xf32>
    %34 = arith.mulf %33, %33 : vector<8x32xf32>
    %cst_16 = arith.constant dense<0.000000e+00> : vector<8xf32>
    %35 = vector.multi_reduction <add>, %34, %cst_16 [1] : vector<8x32xf32> to vector<8xf32>
    %36 = vector.shape_cast %35 : vector<8xf32> to vector<8x1xf32>
    %cst_17 = arith.constant 3.200000e-09 : f32
    %37 = vector.broadcast %cst_17 : f32 to vector<8x1xf32>
    %38 = arith.cmpf ole, %36, %37 : vector<8x1xf32>
    %39 = math.rsqrt %36 : vector<8x1xf32>
    %cst_18 = arith.constant 5.65685415 : f32
    %40 = vector.broadcast %cst_18 : f32 to vector<8x1xf32>
    %41 = arith.mulf %39, %40 : vector<8x1xf32>
    %cst_19 = arith.constant 1.000000e+05 : f32
    %42 = vector.broadcast %cst_19 : f32 to vector<8x1xf32>
    %43 = arith.select %38, %42, %41 : vector<8x1xi1>, vector<8x1xf32>
    %44 = vector.broadcast %0 : f32 to vector<8x1xf32>
    %45 = arith.mulf %43, %44 : vector<8x1xf32>
    %46 = vector.broadcast %45 : vector<8x1xf32> to vector<8x32xf32>
    %47 = arith.mulf %33, %46 : vector<8x32xf32>
    %c0_20 = arith.constant 0 : index
    %c64_21 = arith.constant 64 : index
    %48 = vector.load %arg3[%c0_20, %c64_21] : memref<8x128xf32, #tpu.memory_space<vmem>>, vector<8x32xf32>
    tpu.vector_store %arg3[%c0_20, %c64_21], %47 {strides = array<i32>} : memref<8x128xf32, #tpu.memory_space<vmem>>, vector<8x32xf32>,
    %c0_22 = arith.constant 0 : index
    %c96 = arith.constant 96 : index
    %49 = vector.load %arg2[%c0_22, %c96] : memref<8x128xf32, #tpu.memory_space<vmem>>, vector<8x32xf32>
    %50 = arith.mulf %49, %49 : vector<8x32xf32>
    %cst_23 = arith.constant dense<0.000000e+00> : vector<8xf32>
    %51 = vector.multi_reduction <add>, %50, %cst_23 [1] : vector<8x32xf32> to vector<8xf32>
    %52 = vector.shape_cast %51 : vector<8xf32> to vector<8x1xf32>
    %cst_24 = arith.constant 3.200000e-09 : f32
    %53 = vector.broadcast %cst_24 : f32 to vector<8x1xf32>
    %54 = arith.cmpf ole, %52, %53 : vector<8x1xf32>
    %55 = math.rsqrt %52 : vector<8x1xf32>
    %cst_25 = arith.constant 5.65685415 : f32
    %56 = vector.broadcast %cst_25 : f32 to vector<8x1xf32>
    %57 = arith.mulf %55, %56 : vector<8x1xf32>
    %cst_26 = arith.constant 1.000000e+05 : f32
    %58 = vector.broadcast %cst_26 : f32 to vector<8x1xf32>
    %59 = arith.select %54, %58, %57 : vector<8x1xi1>, vector<8x1xf32>
    %60 = vector.broadcast %0 : f32 to vector<8x1xf32>
    %61 = arith.mulf %59, %60 : vector<8x1xf32>
    %62 = vector.broadcast %61 : vector<8x1xf32> to vector<8x32xf32>
    %63 = arith.mulf %49, %62 : vector<8x32xf32>
    %c0_27 = arith.constant 0 : index
    %c96_28 = arith.constant 96 : index
    %64 = vector.load %arg3[%c0_27, %c96_28] : memref<8x128xf32, #tpu.memory_space<vmem>>, vector<8x32xf32>
    tpu.vector_store %arg3[%c0_27, %c96_28], %63 {strides = array<i32>} : memref<8x128xf32, #tpu.memory_space<vmem>>, vector<8x32xf32>,
    return
  }
  func.func @transform_0(%arg0: i32) -> (i32, i32) {
    %c0_i32 = arith.constant 0 : i32
    %c0_i32_0 = arith.constant 0 : i32
    %c0_i32_1 = arith.constant 0 : i32
    return %c0_i32, %c0_i32_0 : i32, i32
  }
  func.func @transform_1(%arg0: i32) -> (i32, i32) {
    %c0_i32 = arith.constant 0 : i32
    %c0_i32_0 = arith.constant 0 : i32
    return %arg0, %c0_i32 : i32, i32
  }
  func.func @transform_2(%arg0: i32) -> (i32, i32) {
    %c0_i32 = arith.constant 0 : i32
    %c0_i32_0 = arith.constant 0 : i32
    return %arg0, %c0_i32 : i32, i32
  }
}

</mosaic_0001>

<llo_original>
// kernel: tpu_custom_call.1
$region0: #{tpu_custom_call.1}
  #allocation0 [shape = 'u32[]', space=smem, size = 0x4, offset = 0x4, fixed_abs, tag = 'smem constant byte address 0x4 - core index']
  #allocation1 [shape = 'u32[72,128]{1,0:T(1,128)}', space=vmem, size = 0x9000, scoped, tag = 'internal scratch']
  #allocation2 [shape = 'f32[1,1]{1,0:T(1,128)S(6)}', space=smem, size = 0x200, scoped, tag = 'scoped memory for tpu_custom_call.1']
  %s0 = inlined_call_operand.<no memory space> [shape: f32[1,1], index: 0, kind: input, shape index: {}]
  %s1 = inlined_call_operand.hbm [shape: f32[4,128], index: 1, kind: input, shape index: {}]
  %s2 = inlined_call_operand.hbm [shape: f32[4,128], index: 2, kind: output, shape index: {}]
  %s3 = sld [smem:[#allocation0]]
  $region22: #{tpu_custom_call.1} parent=0
    _
  %s5 = ssub.s32 1, %s3
  %s6 = scalar_select 0, %s5, %s3
  %7 = sst [smem:[#allocation2]] %s0
  $region1: #{tpu_custom_call.1} parent=0
    #allocation3 [shape = 'u8[4096]{0}', space=vmem, size = 0x1000, scoped, tag = 'input window, operand 1, single buffered']
    #allocation4 [shape = 's32[1]{0}', space=sflag, size = 0x4, scoped, tag = 'scoped memory for tpu_custom_call.1']
    #allocation5 [shape = 's32[1]{0}', space=sflag, size = 0x4, scoped, tag = 'scoped memory for tpu_custom_call.1']
    #allocation6 [shape = 'u8[4096]{0}', space=vmem, size = 0x1000, scoped, tag = 'output window, operand 0, single buffered']
    %8 = vsyncpa [#allocation4], 0
    %9 = vsyncpa [#allocation5], 0
    // Predicated region
    $region2: #{tpu_custom_call.1} parent=1 // pred_check
      _
    $region3: #{tpu_custom_call.1} parent=1 // pred_check_branch
      %11 = sbr.rel (0) target = $region5
    $region4: #{tpu_custom_call.1} parent=1 // pred_region
      _
    $region5: #{tpu_custom_call.1} parent=1 // pred_fallthru
      _
    // Predicated region
    $region6: #{tpu_custom_call.1} parent=1 // pred_check
      _
    $region7: #{tpu_custom_call.1} parent=1 // pred_check_branch
      %13 = sbr.rel (0) target = $region9
    $region8: #{tpu_custom_call.1} parent=1 // pred_region
      %15 = vsyncadd [#allocation4], 64
      %s16 = sshll.u32 %s1, 4
      %s17 = int_to_ptr.hbm [resolvable:$true] %s16
      %s18 = sshll.u32 [#allocation3], 4
      %s19 = int_to_ptr.vmem [resolvable:$true] %s18
      %24 = dma.hbm_to_vmem [thread:$0]  %s17, 64, %s19, [#allocation4], 64, 64, 4
    $region9: #{tpu_custom_call.1} parent=1 // pred_fallthru
      _
    // Predicated region
    $region10: #{tpu_custom_call.1} parent=1 // pred_check
      _
    $region11: #{tpu_custom_call.1} parent=1 // pred_check_branch
      %26 = sbr.rel (0) target = $region13
    $region12: #{tpu_custom_call.1} parent=1 // pred_region
      %28 = dma.done [#allocation4], 128
    $region13: #{tpu_custom_call.1} parent=1 // pred_fallthru
      _
    %s29 = sld [smem:[#allocation2]]
    %v30 = vld [vmem:[#allocation3] sm:$0xff]
    %v31 = vmul.f32 %v30, %v30
    %vm32 = vcmask 261120
    %v33 = vsel %vm32, %v31, 0.0
    %34 = vadd.xlane.f32.xlu0 %v33
    %v35 = vpop.xlane.xlu0 %34
    %vm36 = vcmp.le.f32.partialorder %v35, 3.2e-09
    %v37 = vrsqrt.pop %v35
    %v38 = vmul.f32 %v37, %v35
    %v39 = vmul.f32 %v38, %v37
    %v40 = vmul.f32 0.5, %v39
    %v41 = vsub.f32 1.5, %v40
    %v42 = vmul.f32 %v37, %v41
    %vm43 = vweird.f32 %v35
    %vm44 = vweird.f32 %v37
    %vm45 = vmor %vm43, %vm44
    %v46 = vsel %vm45, %v37, %v42
    %v47 = vmul.f32 %v46, 5.656854
    %v48 = vsel %vm36, 100000.0, %v47
    %v49 = vstv %s29
    %v50 = vmul.f32 %v48, %v49
    %v51 = vmul.f32 %v30, %v50
    %52 = vst.msk [vmem:[#allocation6] sm:$0xff] %vm32, %v51
    %v53 = vld [vmem:[#allocation3] sm:$0xff]
    %v54 = vmul.f32 %v53, %v53
    %56 = vrot.lane.b32.xlu0 %v54, 96
    %v57 = vpop.permute.xlu0 %56
    %v59 = vsel %vm32, %v57, 0.0
    %60 = vadd.xlane.f32.xlu0 %v59
    %v61 = vpop.xlane.xlu0 %60
    %vm62 = vcmp.le.f32.partialorder %v61, 3.2e-09
    %v63 = vrsqrt.pop %v61
    %v64 = vmul.f32 %v63, %v61
    %v65 = vmul.f32 %v64, %v63
    %v66 = vmul.f32 0.5, %v65
    %v67 = vsub.f32 1.5, %v66
    %v68 = vmul.f32 %v63, %v67
    %vm69 = vweird.f32 %v61
    %vm70 = vweird.f32 %v63
    %vm71 = vmor %vm69, %vm70
    %v72 = vsel %vm71, %v63, %v68
    %v73 = vmul.f32 %v72, 5.656854
    %v74 = vsel %vm62, 100000.0, %v73
    %v75 = vmul.f32 %v74, %v49
    %v76 = vmul.f32 %v53, %v75
    %vm77 = vcmask 523520
    %78 = vst.msk [vmem:[#allocation6] sm:$0xff] %vm77, %v76
    %v79 = vld [vmem:[#allocation3] sm:$0xff]
    %v80 = vmul.f32 %v79, %v79
    %82 = vrot.lane.b32.xlu0 %v80, 64
    %v83 = vpop.permute.xlu0 %82
    %v85 = vsel %vm32, %v83, 0.0
    %86 = vadd.xlane.f32.xlu0 %v85
    %v87 = vpop.xlane.xlu0 %86
    %vm88 = vcmp.le.f32.partialorder %v87, 3.2e-09
    %v89 = vrsqrt.pop %v87
    %v90 = vmul.f32 %v89, %v87
    %v91 = vmul.f32 %v90, %v89
    %v92 = vmul.f32 0.5, %v91
    %v93 = vsub.f32 1.5, %v92
    %v94 = vmul.f32 %v89, %v93
    %vm95 = vweird.f32 %v87
    %vm96 = vweird.f32 %v89
    %vm97 = vmor %vm95, %vm96
    %v98 = vsel %vm97, %v89, %v94
    %v99 = vmul.f32 %v98, 5.656854
    %v100 = vsel %vm88, 100000.0, %v99
    %v101 = vmul.f32 %v100, %v49
    %v102 = vmul.f32 %v79, %v101
    %vm103 = vcmask 785920
    %104 = vst.msk [vmem:[#allocation6] sm:$0xff] %vm103, %v102
    %v105 = vld [vmem:[#allocation3] sm:$0xff]
    %v106 = vmul.f32 %v105, %v105
    %108 = vrot.lane.b32.xlu0 %v106, 32
    %v109 = vpop.permute.xlu0 %108
    %v111 = vsel %vm32, %v109, 0.0
    %112 = vadd.xlane.f32.xlu0 %v111
    %v113 = vpop.xlane.xlu0 %112
    %vm114 = vcmp.le.f32.partialorder %v113, 3.2e-09
    %v115 = vrsqrt.pop %v113
    %v116 = vmul.f32 %v115, %v113
    %v117 = vmul.f32 %v116, %v115
    %v118 = vmul.f32 0.5, %v117
    %v119 = vsub.f32 1.5, %v118
    %v120 = vmul.f32 %v115, %v119
    %vm121 = vweird.f32 %v113
    %vm122 = vweird.f32 %v115
    %vm123 = vmor %vm121, %vm122
    %v124 = vsel %vm123, %v115, %v120
    %v125 = vmul.f32 %v124, 5.656854
    %v126 = vsel %vm114, 100000.0, %v125
    %v127 = vmul.f32 %v126, %v49
    %v128 = vmul.f32 %v105, %v127
    %vm129 = vcmask 1048320
    %130 = vst.msk [vmem:[#allocation6] sm:$0xff] %vm129, %v128
    // Predicated region
    $region14: #{tpu_custom_call.1} parent=1 // pred_check
      _
    $region15: #{tpu_custom_call.1} parent=1 // pred_check_branch
      %132 = sbr.rel (0) target = $region17
    $region16: #{tpu_custom_call.1} parent=1 // pred_region
      %134 = vsyncadd [#allocation5], 64
      %s135 = sshll.u32 [#allocation6], 4
      %s136 = int_to_ptr.vmem [resolvable:$true] %s135
      %s137 = sshll.u32 %s2, 4
      %s138 = int_to_ptr.hbm [resolvable:$true] %s137
      %143 = dma.vmem_to_hbm [thread:$0]  %s136, 64, %s138, [#allocation5], 64, 64, 4
    $region17: #{tpu_custom_call.1} parent=1 // pred_fallthru
      _
    // Predicated region
    $region18: #{tpu_custom_call.1} parent=1 // pred_check
      _
    $region19: #{tpu_custom_call.1} parent=1 // pred_check_branch
      %145 = sbr.rel (0) target = $region21
    $region20: #{tpu_custom_call.1} parent=1 // pred_region
      %147 = dma.done [#allocation5], 128
    $region21: #{tpu_custom_call.1} parent=1 // pred_fallthru
      _
    %148 = vsyncpa [#allocation4], 1
    %149 = vsyncpa [#allocation5], 1

</llo_original>
